<compile_context>
chip_gen: v7x
topology: tpu7x:2x2x1
jax: 0.10.0
libtpu: 0.0.40
codegen_flags: <defaults>
</compile_context>

<pallas_src>
import functools

import jax
import jax.numpy as jnp
from jax.experimental import pallas as pl
from jax.experimental.pallas import tpu as pltpu

_VMEM_LIMIT = 48 * 1024 * 1024  # > 32 MiB default scoped limit, < 64 MiB (v7x physical)


# ---------------------------------------------------------------------------
# tile pickers
# ---------------------------------------------------------------------------
def _pick_tile(dim, target, align):
    """Largest `align`-multiple divisor of `dim` that is <= target, else full dim."""
    if dim <= target:
        return dim
    t = (target // align) * align
    while t >= align:
        if dim % t == 0:
            return t
        t -= align
    return dim


def _pick_batch_tile(batch, max_seq, target_rows):
    """Batches per row-block: must divide B and give (8,128)-legal sublane counts."""
    desired = max(1, target_rows // max(max_seq, 1))
    for bp in range(min(batch, desired), 0, -1):
        if batch % bp == 0 and (bp == batch or bp % 8 == 0):
            return bp
    return batch


# ---------------------------------------------------------------------------
# kernels
# ---------------------------------------------------------------------------
def _proj_relu_kernel(x_ref, w_ref, b_ref, o_ref, acc_ref):
    """q_fa = relu(question @ W_txt + b_txt), tiled over (H, K); K is inner axis."""
    k = pl.program_id(1)

    @pl.when(k == 0)
    def _():
        acc_ref[...] = jnp.zeros_like(acc_ref)

    acc_ref[...] += jnp.dot(x_ref[...], w_ref[...],
                            preferred_element_type=jnp.float32)

    @pl.when(k == pl.num_programs(1) - 1)
    def _():
        o_ref[...] = jnp.maximum(acc_ref[...] + b_ref[...], 0.0).astype(o_ref.dtype)


def _fused_noctx_kernel(x_ref, q_ref, w_ref, b_ref, out_ref, acc_ref, *, L, bp):
    """out = relu(x @ W + b) * q_fa[batch], rows flattened over (batch, seq)."""
    k = pl.program_id(2)

    @pl.when(k == 0)
    def _():
        acc_ref[...] = jnp.zeros_like(acc_ref)

    acc_ref[...] += jnp.dot(x_ref[...], w_ref[...],
                            preferred_element_type=jnp.float32)

    @pl.when(k == pl.num_programs(2) - 1)
    def _():
        th = out_ref.shape[-1]
        q = q_ref[...][:, None, :]                                   # (bp, 1, th) f32
        y = jnp.maximum(acc_ref[...].reshape(bp, L, th) + b_ref[...], 0.0) * q
        out_ref[...] = y.astype(out_ref.dtype)


def _fused_ctx_kernel(xi_ref, xc_ref, q_ref, wi_ref, bi_ref, wc_ref, bc_ref,
                      out_ref, acc_i, acc_c, *, L, Lc, bp, nk_i, nk_c):
    """Image + context projections fused; direct slice stores into [bp, L+Lc, th]."""
    k = pl.program_id(2)
    nk = max(nk_i, nk_c)

    @pl.when(k == 0)
    def _():
        acc_i[...] = jnp.zeros_like(acc_i)
        acc_c[...] = jnp.zeros_like(acc_c)

    def _acc_img():
        acc_i[...] += jnp.dot(xi_ref[...], wi_ref[...],
                              preferred_element_type=jnp.float32)

    def _acc_ctx():
        acc_c[...] += jnp.dot(xc_ref[...], wc_ref[...],
                              preferred_element_type=jnp.float32)

    if nk_i == nk:
        _acc_img()
    else:
        pl.when(k < nk_i)(_acc_img)
    if nk_c == nk:
        _acc_ctx()
    else:
        pl.when(k < nk_c)(_acc_ctx)

    @pl.when(k == pl.num_programs(2) - 1)
    def _():
        th = out_ref.shape[-1]
        q = q_ref[...][:, None, :]                                   # (bp, 1, th) f32
        yi = jnp.maximum(acc_i[...].reshape(bp, L, th) + bi_ref[...], 0.0) * q
        yc = jnp.maximum(acc_c[...].reshape(bp, Lc, th) + bc_ref[...], 0.0) * q
        out_ref[:, :L, :] = yi.astype(out_ref.dtype)                 # direct slice store
        out_ref[:, L:, :] = yc.astype(out_ref.dtype)                 # (no concatenate)


# ---------------------------------------------------------------------------
# wrapper
# ---------------------------------------------------------------------------
def non_linear_element_multiply(image_feat, question_emb, params, context_emb=None,
                                *, compute_dtype=None, out_dtype=None,
                                target_rows=512, target_tile=512):
    """image_feat [B,L,D_img]; question_emb [B,D_q]; context_emb [B,Lc,D_ctx] or None."""
    B, L, D_img = image_feat.shape
    D_q = question_emb.shape[-1]
    H = params["w_img"].shape[-1]
    if out_dtype is None:
        out_dtype = image_feat.dtype

    # Optional bf16 MXU inputs (f32 accumulation / f32 epilogue everywhere).
    def mx(x):
        return x.astype(compute_dtype) if compute_dtype is not None else x

    th = _pick_tile(H, target_tile, 128)
    nh = H // th

    cparams2 = pltpu.CompilerParams(dimension_semantics=("parallel", "arbitrary"),
                                    vmem_limit_bytes=_VMEM_LIMIT)
    cparams3 = pltpu.CompilerParams(
        dimension_semantics=("parallel", "parallel", "arbitrary"),
        vmem_limit_bytes=_VMEM_LIMIT)

    # --- hoisted question projection: q_fa[B, H] (computed once for all batches) ---
    tkq = _pick_tile(D_q, target_tile, 128)
    nkq = D_q // tkq
    q_fa = pl.pallas_call(
        _proj_relu_kernel,
        out_shape=jax.ShapeDtypeStruct((B, H), jnp.float32),
        grid_spec=pltpu.PrefetchScalarGridSpec(
            num_scalar_prefetch=0, grid=(nh, nkq),
            in_specs=[pl.BlockSpec((B, tkq), lambda h, k: (0, k)),
                      pl.BlockSpec((tkq, th), lambda h, k: (k, h)),
                      pl.BlockSpec((1, th), lambda h, k: (0, h))],
            out_specs=pl.BlockSpec((B, th), lambda h, k: (0, h)),
            scratch_shapes=[pltpu.VMEM((B, th), jnp.float32)]),
        compiler_params=cparams2,
    )(mx(question_emb), mx(params["w_txt"]), params["b_txt"])

    tki = _pick_tile(D_img, target_tile, 128)
    nki = D_img // tki
    x_img = image_feat.reshape(B * L, D_img)

    if context_emb is not None:
        Lc, D_ctx = context_emb.shape[1], context_emb.shape[2]
        tkc = _pick_tile(D_ctx, target_tile, 128)
        nkc = D_ctx // tkc
        nk = max(nki, nkc)
        bp = _pick_batch_tile(B, max(L, Lc), target_rows)
        nb = B // bp
        x_ctx = context_emb.reshape(B * Lc, D_ctx)

        # Clamped index maps keep the block index constant past the shorter
        # operand's last K step, so Pallas skips the redundant re-fetch.
        if nki == nk:
            xi_map = lambda r, h, k: (r, k)
            wi_map = lambda r, h, k: (k, h)
        else:
            xi_map = lambda r, h, k: (r, jnp.minimum(k, nki - 1))
            wi_map = lambda r, h, k: (jnp.minimum(k, nki - 1), h)
        if nkc == nk:
            xc_map = lambda r, h, k: (r, k)
            wc_map = lambda r, h, k: (k, h)
        else:
            xc_map = lambda r, h, k: (r, jnp.minimum(k, nkc - 1))
            wc_map = lambda r, h, k: (jnp.minimum(k, nkc - 1), h)

        kernel = functools.partial(_fused_ctx_kernel, L=L, Lc=Lc, bp=bp,
                                   nk_i=nki, nk_c=nkc)
        return pl.pallas_call(
            kernel,
            out_shape=jax.ShapeDtypeStruct((B, L + Lc, H), out_dtype),
            grid_spec=pltpu.PrefetchScalarGridSpec(
                num_scalar_prefetch=0, grid=(nb, nh, nk),
                in_specs=[
                    pl.BlockSpec((bp * L, tki), xi_map),
                    pl.BlockSpec((bp * Lc, tkc), xc_map),
                    pl.BlockSpec((bp, th), lambda r, h, k: (r, h)),
                    pl.BlockSpec((tki, th), wi_map),
                    pl.BlockSpec((1, th), lambda r, h, k: (0, h)),
                    pl.BlockSpec((tkc, th), wc_map),
                    pl.BlockSpec((1, th), lambda r, h, k: (0, h)),
                ],
                out_specs=pl.BlockSpec((bp, L + Lc, th), lambda r, h, k: (r, 0, h)),
                scratch_shapes=[pltpu.VMEM((bp * L, th), jnp.float32),
                                pltpu.VMEM((bp * Lc, th), jnp.float32)]),
            compiler_params=cparams3,
        )(mx(x_img), mx(x_ctx), q_fa,
          mx(params["w_img"]), params["b_img"],
          mx(params["w_ctx"]), params["b_ctx"])
    else:
        bp = _pick_batch_tile(B, L, target_rows)
        nb = B // bp
        kernel = functools.partial(_fused_noctx_kernel, L=L, bp=bp)
        return pl.pallas_call(
            kernel,
            out_shape=jax.ShapeDtypeStruct((B, L, H), out_dtype),
            grid_spec=pltpu.PrefetchScalarGridSpec(
                num_scalar_prefetch=0, grid=(nb, nh, nki),
                in_specs=[
                    pl.BlockSpec((bp * L, tki), lambda r, h, k: (r, k)),
                    pl.BlockSpec((bp, th), lambda r, h, k: (r, h)),
                    pl.BlockSpec((tki, th), lambda r, h, k: (k, h)),
                    pl.BlockSpec((1, th), lambda r, h, k: (0, h)),
                ],
                out_specs=pl.BlockSpec((bp, L, th), lambda r, h, k: (r, 0, h)),
                scratch_shapes=[pltpu.VMEM((bp * L, th), jnp.float32)]),
            compiler_params=cparams3,
        )(mx(x_img), q_fa, mx(params["w_img"]), params["b_img"])


# ---------------------------------------------------------------------------
# reference + test
# ---------------------------------------------------------------------------
def _reference(image_feat, question_emb, params, context_emb=None):
    img_fa = jax.nn.relu(image_feat @ params["w_img"] + params["b_img"][0])
    q_fa = jax.nn.relu(question_emb @ params["w_txt"] + params["b_txt"][0])[:, None, :]
    joint = img_fa * q_fa
    if context_emb is not None:
        ctx_fa = jax.nn.relu(context_emb @ params["w_ctx"] + params["b_ctx"][0])
        joint = jnp.concatenate([joint, ctx_fa * q_fa], axis=1)
    return joint


if __name__ == "__main__":
    B, L, Lc = 2, 8, 8
    D_img, D_q, D_ctx, H = 48, 32, 40, 128

    key = jax.random.PRNGKey(0)
    ks = jax.random.split(key, 9)
    image_feat = jax.random.normal(ks[0], (B, L, D_img), jnp.float32)
    question_emb = jax.random.normal(ks[1], (B, D_q), jnp.float32)
    context_emb = jax.random.normal(ks[2], (B, Lc, D_ctx), jnp.float32)

    params = {
        "w_img": jax.random.normal(ks[3], (D_img, H), jnp.float32) * 0.05,
        "b_img": jax.random.normal(ks[4], (1, H), jnp.float32) * 0.01,
        "w_txt": jax.random.normal(ks[5], (D_q, H), jnp.float32) * 0.05,
        "b_txt": jax.random.normal(ks[6], (1, H), jnp.float32) * 0.01,
        "w_ctx": jax.random.normal(ks[7], (D_ctx, H), jnp.float32) * 0.05,
        "b_ctx": jax.random.normal(ks[8], (1, H), jnp.float32) * 0.01,
    }

    # With context (f32 MXU path, exact-ish)
    out_ctx = jax.block_until_ready(
        non_linear_element_multiply(image_feat, question_emb, params, context_emb))
    ref_ctx = _reference(image_feat, question_emb, params, context_emb)
    assert out_ctx.shape == (B, L + Lc, H)
    assert jnp.allclose(out_ctx, ref_ctx, atol=1e-5, rtol=1e-5)

    # Without context
    out_nc = jax.block_until_ready(
        non_linear_element_multiply(image_feat, question_emb, params, None))
    ref_nc = _reference(image_feat, question_emb, params, None)
    assert out_nc.shape == (B, L, H)
    assert jnp.allclose(out_nc, ref_nc, atol=1e-5, rtol=1e-5)

    # bf16 MXU inputs, f32 accumulation/epilogue (looser tolerance)
    out_bf = jax.block_until_ready(
        non_linear_element_multiply(image_feat, question_emb, params, context_emb,
                                    compute_dtype=jnp.bfloat16))
    assert out_bf.shape == (B, L + Lc, H)
    assert jnp.allclose(out_bf, ref_ctx, atol=5e-2, rtol=5e-2)

    print("KERNEL_OK")
</pallas_src>

<mosaic_0001>
module attributes {stable_mosaic.version = 11 : i64} {
  func.func @_proj_relu_kernel(%arg0: i32, %arg1: i32, %arg2: memref<2x32xf32, #tpu.memory_space<vmem>>, %arg3: memref<32x128xf32, #tpu.memory_space<vmem>>, %arg4: memref<1x128xf32, #tpu.memory_space<vmem>>, %arg5: memref<2x128xf32, #tpu.memory_space<vmem>>, %arg6: memref<2x128xf32, #tpu.memory_space<vmem>>) attributes {dimension_semantics = [#tpu.dimension_semantics<parallel>, #tpu.dimension_semantics<arbitrary>], iteration_bounds = array<i64: 1, 1>, scalar_prefetch = 0 : i64, scratch_operands = 1 : i64, tpu.core_type = #tpu.core_type<tc>, window_params = [{transform_indices = @transform_0, window_bounds = array<i64: 2, 32>}, {transform_indices = @transform_1, window_bounds = array<i64: 32, 128>}, {transform_indices = @transform_2, window_bounds = array<i64: 1, 128>}, {transform_indices = @transform_3, window_bounds = array<i64: 2, 128>}]} {
    %c0_i32 = arith.constant 0 : i32
    %0 = arith.cmpi eq, %arg1, %c0_i32 : i32
    %1 = arith.extui %0 : i1 to i32
    %c0_i32_0 = arith.constant 0 : i32
    %2 = arith.cmpi ne, %1, %c0_i32_0 : i32
    scf.if %2 {
      %cst_10 = arith.constant 0.000000e+00 : f32
      %12 = vector.broadcast %cst_10 : f32 to vector<2x128xf32>
      %c0_11 = arith.constant 0 : index
      %c0_12 = arith.constant 0 : index
      %13 = vector.load %arg6[%c0_11, %c0_12] : memref<2x128xf32, #tpu.memory_space<vmem>>, vector<2x128xf32>
      tpu.vector_store %arg6[%c0_11, %c0_12], %12 {strides = array<i32>} : memref<2x128xf32, #tpu.memory_space<vmem>>, vector<2x128xf32>,
    } else {
    }
    %c0 = arith.constant 0 : index
    %c0_1 = arith.constant 0 : index
    %3 = vector.load %arg6[%c0, %c0_1] : memref<2x128xf32, #tpu.memory_space<vmem>>, vector<2x128xf32>
    %c0_2 = arith.constant 0 : index
    %c0_3 = arith.constant 0 : index
    %4 = vector.load %arg2[%c0_2, %c0_3] : memref<2x32xf32, #tpu.memory_space<vmem>>, vector<2x32xf32>
    %c0_4 = arith.constant 0 : index
    %c0_5 = arith.constant 0 : index
    %5 = vector.load %arg3[%c0_4, %c0_5] : memref<32x128xf32, #tpu.memory_space<vmem>>, vector<32x128xf32>
    %cst = arith.constant dense<0.000000e+00> : vector<2x128xf32>
    %6 = tpu.matmul %4, %5, %cst {dimension_numbers = #tpu.dot_dimension_numbers<[1], [0], [0], [1], [0, 0, 1, 1], [], []>} : vector<2x32xf32>, vector<32x128xf32>, vector<2x128xf32> -> vector<2x128xf32>
    %7 = arith.addf %3, %6 : vector<2x128xf32>
    %c0_6 = arith.constant 0 : index
    %c0_7 = arith.constant 0 : index
    %8 = vector.load %arg6[%c0_6, %c0_7] : memref<2x128xf32, #tpu.memory_space<vmem>>, vector<2x128xf32>
    tpu.vector_store %arg6[%c0_6, %c0_7], %7 {strides = array<i32>} : memref<2x128xf32, #tpu.memory_space<vmem>>, vector<2x128xf32>,
    %c0_i32_8 = arith.constant 0 : i32
    %9 = arith.cmpi eq, %arg1, %c0_i32_8 : i32
    %10 = arith.extui %9 : i1 to i32
    %c0_i32_9 = arith.constant 0 : i32
    %11 = arith.cmpi ne, %10, %c0_i32_9 : i32
    scf.if %11 {
      %c0_10 = arith.constant 0 : index
      %c0_11 = arith.constant 0 : index
      %12 = vector.load %arg6[%c0_10, %c0_11] : memref<2x128xf32, #tpu.memory_space<vmem>>, vector<2x128xf32>
      %c0_12 = arith.constant 0 : index
      %c0_13 = arith.constant 0 : index
      %13 = vector.load %arg4[%c0_12, %c0_13] : memref<1x128xf32, #tpu.memory_space<vmem>>, vector<1x128xf32>
      %14 = vector.broadcast %13 : vector<1x128xf32> to vector<2x128xf32>
      %15 = arith.addf %12, %14 : vector<2x128xf32>
      %cst_14 = arith.constant 0.000000e+00 : f32
      %16 = vector.broadcast %cst_14 : f32 to vector<2x128xf32>
      %17 = arith.maximumf %15, %16 : vector<2x128xf32>
      %c0_15 = arith.constant 0 : index
      %c0_16 = arith.constant 0 : index
      %18 = vector.load %arg5[%c0_15, %c0_16] : memref<2x128xf32, #tpu.memory_space<vmem>>, vector<2x128xf32>
      tpu.vector_store %arg5[%c0_15, %c0_16], %17 {strides = array<i32>} : memref<2x128xf32, #tpu.memory_space<vmem>>, vector<2x128xf32>,
    } else {
    }
    return
  }
  func.func @transform_0(%arg0: i32, %arg1: i32) -> (i32, i32) {
    %c0_i32 = arith.constant 0 : i32
    %c0_i32_0 = arith.constant 0 : i32
    return %c0_i32, %arg1 : i32, i32
  }
  func.func @transform_1(%arg0: i32, %arg1: i32) -> (i32, i32) {
    %c0_i32 = arith.constant 0 : i32
    return %arg1, %arg0 : i32, i32
  }
  func.func @transform_2(%arg0: i32, %arg1: i32) -> (i32, i32) {
    %c0_i32 = arith.constant 0 : i32
    %c0_i32_0 = arith.constant 0 : i32
    return %c0_i32, %arg0 : i32, i32
  }
  func.func @transform_3(%arg0: i32, %arg1: i32) -> (i32, i32) {
    %c0_i32 = arith.constant 0 : i32
    %c0_i32_0 = arith.constant 0 : i32
    return %c0_i32, %arg0 : i32, i32
  }
}

</mosaic_0001>

<llo_original>
// kernel: tpu_custom_call.1
$region0: #{tpu_custom_call.1}
  #allocation0 [shape = 'u32[]', space=smem, size = 0x4, offset = 0x4, fixed_abs, tag = 'smem constant byte address 0x4 - core index']
  #allocation1 [shape = 'u32[144,128]{1,0:T(1,128)}', space=vmem, size = 0x12000, scoped, tag = 'internal scratch']
  #allocation2 [shape = 'f32[2,128]{1,0:T(2,128)}', space=vmem, size = 0x400, scoped, tag = 'scratch operand']
  %s0 = inlined_call_operand.hbm [shape: f32[2,32], index: 0, kind: input, shape index: {}]
  %s1 = inlined_call_operand.hbm [shape: f32[32,128], index: 1, kind: input, shape index: {}]
  %s2 = inlined_call_operand.vmem [shape: f32[1,128], index: 2, kind: input, shape index: {}]
  %s3 = inlined_call_operand.hbm [shape: f32[2,128], index: 3, kind: output, shape index: {}]
  %s4 = sld [smem:[#allocation0]]
  $region38: #{tpu_custom_call.1} parent=0
    _
  %s6 = ssub.s32 1, %s4
  %s7 = scalar_select 0, %s6, %s4
  $region1: #{tpu_custom_call.1} parent=0
    #allocation3 [shape = 'u8[1024]{0}', space=vmem, size = 0x400, scoped, tag = 'input window, operand 0, single buffered']
    #allocation4 [shape = 's32[1]{0}', space=sflag, size = 0x4, scoped, tag = 'scoped memory for tpu_custom_call.1']
    #allocation5 [shape = 's32[1]{0}', space=sflag, size = 0x4, scoped, tag = 'scoped memory for tpu_custom_call.1']
    #allocation6 [shape = 'u8[16384]{0}', space=vmem, size = 0x4000, scoped, tag = 'input window, operand 1, single buffered']
    #allocation7 [shape = 's32[1]{0}', space=sflag, size = 0x4, scoped, tag = 'scoped memory for tpu_custom_call.1']
    #allocation8 [shape = 'u8[1024]{0}', space=vmem, size = 0x400, scoped, tag = 'output window, operand 0, single buffered']
    %8 = vsyncpa [#allocation4], 0
    %9 = vsyncpa [#allocation7], 0
    %10 = vsyncpa [#allocation5], 0
    // Predicated region
    $region2: #{tpu_custom_call.1} parent=1 // pred_check
      _
    $region3: #{tpu_custom_call.1} parent=1 // pred_check_branch
      %12 = sbr.rel (0) target = $region5
    $region4: #{tpu_custom_call.1} parent=1 // pred_region
      %s14 = ssub.s32 32, 32
      %15 = vsyncadd [#allocation4], %s14
      %s17 = sshll.u32 [#allocation3], 4
      %s18 = int_to_ptr.vmem [resolvable:$true] %s17
      %20 = dma.hbm_to_vmem [thread:$0]  %s0, 32, %s18, [#allocation4]
    $region5: #{tpu_custom_call.1} parent=1 // pred_fallthru
      _
    // Predicated region
    $region6: #{tpu_custom_call.1} parent=1 // pred_check
      _
    $region7: #{tpu_custom_call.1} parent=1 // pred_check_branch
      %22 = sbr.rel (0) target = $region9
    $region8: #{tpu_custom_call.1} parent=1 // pred_region
      %s24 = ssub.s32 512, 512
      %25 = vsyncadd [#allocation7], %s24
      %s26 = sshll.u32 [#allocation6], 4
      %s27 = int_to_ptr.vmem [resolvable:$true] %s26
      %32 = dma.hbm_to_vmem [thread:$0]  %s1, 512, %s27, [#allocation7], 128, 128, 8
    $region9: #{tpu_custom_call.1} parent=1 // pred_fallthru
      _
    // Predicated region
    $region10: #{tpu_custom_call.1} parent=1 // pred_check
      _
    $region11: #{tpu_custom_call.1} parent=1 // pred_check_branch
      %34 = sbr.rel (0) target = $region13
    $region12: #{tpu_custom_call.1} parent=1 // pred_region
      _
    $region13: #{tpu_custom_call.1} parent=1 // pred_fallthru
      _
    // Predicated region
    $region14: #{tpu_custom_call.1} parent=1 // pred_check
      _
    $region15: #{tpu_custom_call.1} parent=1 // pred_check_branch
      %36 = sbr.rel (0) target = $region17
    $region16: #{tpu_custom_call.1} parent=1 // pred_region
      %37 = dma.done [#allocation4], 32
    $region17: #{tpu_custom_call.1} parent=1 // pred_fallthru
      _
    // Predicated region
    $region18: #{tpu_custom_call.1} parent=1 // pred_check
      _
    $region19: #{tpu_custom_call.1} parent=1 // pred_check_branch
      %39 = sbr.rel (0) target = $region21
    $region20: #{tpu_custom_call.1} parent=1 // pred_region
      %40 = dma.done [#allocation7], 512
    $region21: #{tpu_custom_call.1} parent=1 // pred_fallthru
      _
    %p41 = scmp.eq.s32.totalorder 0, 0
    // Predicated region
    $region22: #{tpu_custom_call.1} parent=1 // pred_check
      %p42 = pneg %p41
    $region23: #{tpu_custom_call.1} parent=1 // pred_check_branch
      %44 = sbr.rel (%p42) target = $region25
    $region24: #{tpu_custom_call.1} parent=1 // pred_region
      %45 = vst [vmem:[#allocation2] sm:$0x3] 0.0
    $region25: #{tpu_custom_call.1} parent=1 // pred_fallthru
      _
    %v46 = vld [vmem:[#allocation2] sm:$0x3]
    %v47 = vld [vmem:[#allocation3] sm:$0x3]
    %v48 = vld [vmem:[#allocation6] sm:$0xff]
    %v49 = vld [vmem:[#allocation6 + $0x8] sm:$0xff]
    %v50 = vld [vmem:[#allocation6 + $0x10] sm:$0xff]
    %v51 = vld [vmem:[#allocation6 + $0x18] sm:$0xff]
    %vm52 = vcmask 261120
    %v54 = vsel %vm52, %v47, 0
    %56 = vmatprep.subr.mxu0 0.0
    %57 = vmatpush1.msra.mxu0 %v48
    %58 = vmatprep.subr.mxu0 0.0
    %59 = vmatpush1.msra.mxu0 %v49
    %60 = vmatprep.subr.mxu0 0.0
    %61 = vmatpush1.msra.mxu0 %v50
    %62 = vmatprep.subr.mxu0 0.0
    %63 = vmatpush1.msra.mxu0 %v51
    %64 = vmatprep.subr.mxu0 0.0
    %65 = vmatpush1.msra.mxu0 0.0
    %66 = vmatprep.subr.mxu0 0.0
    %67 = vmatpush1.msra.mxu0 0.0
    %68 = vmatprep.subr.mxu0 0.0
    %69 = vmatpush1.msra.mxu0 0.0
    %70 = vmatprep.subr.mxu0 0.0
    %71 = vmatpush1.msra.mxu0 0.0
    %72 = vmatprep.subr.mxu0 0.0
    %73 = vmatpush1.msra.mxu0 0.0
    %74 = vmatprep.subr.mxu0 0.0
    %75 = vmatpush1.msra.mxu0 0.0
    %76 = vmatprep.subr.mxu0 0.0
    %77 = vmatpush1.msra.mxu0 0.0
    %78 = vmatprep.subr.mxu0 0.0
    %79 = vmatpush1.msra.mxu0 0.0
    %80 = vmatprep.subr.mxu0 0.0
    %81 = vmatpush1.msra.mxu0 0.0
    %82 = vmatprep.subr.mxu0 0.0
    %83 = vmatpush1.msra.mxu0 0.0
    %84 = vmatprep.subr.mxu0 0.0
    %85 = vmatpush1.msra.mxu0 0.0
    %86 = vmatprep.subr.mxu0 0.0
    %87 = vmatpush1.msra.mxu0 0.0
    %88 = vmatprep.subr.mxu0 0.0
    %89 = vmatpush1.msra.mxu0 0.0
    %90 = vmatprep.subr.mxu0 0.0
    %91 = vmatpush1.msra.mxu0 0.0
    %92 = vmatprep.subr.mxu0 0.0
    %93 = vmatpush1.msra.mxu0 0.0
    %94 = vmatprep.subr.mxu0 0.0
    %95 = vmatpush1.msra.mxu0 0.0
    %96 = vmatprep.subr.mxu0 0.0
    %97 = vmatpush1.msra.mxu0 0.0
    %98 = vmatprep.subr.mxu0 0.0
    %99 = vmatpush1.msra.mxu0 0.0
    %100 = vmatprep.subr.mxu0 0.0
    %101 = vmatpush1.msra.mxu0 0.0
    %102 = vmatprep.subr.mxu0 0.0
    %103 = vmatpush1.msra.mxu0 0.0
    %104 = vmatprep.subr.mxu0 0.0
    %105 = vmatpush1.msra.mxu0 0.0
    %106 = vmatprep.subr.mxu0 0.0
    %107 = vmatpush1.msra.mxu0 0.0
    %108 = vmatprep.subr.mxu0 0.0
    %109 = vmatpush1.msra.mxu0 0.0
    %110 = vmatprep.subr.mxu0 0.0
    %111 = vmatpush1.msra.mxu0 0.0
    %112 = vmatprep.subr.mxu0 0.0
    %113 = vmatpush1.msra.mxu0 0.0
    %114 = vmatprep.subr.mxu0 0.0
    %115 = vmatpush1.msra.mxu0 0.0
    %116 = vmatprep.subr.mxu0 0.0
    %117 = vmatpush1.msra.mxu0 0.0
    %118 = vmatprep.subr.mxu0 0.0
    %119 = vmatpush1.msra.mxu0 0.0
    %120 = vmatprep.mubr.f32.mxu0 0.0
    %121 = vmatmul.mubr.f32.gmra.mrb[0].mxu0 %v54
    %v122 = vpop.f32.mrb[0].mxu0
    %v123 = vadd.f32 0.0, %v122
    %v124 = vpop.f32.mrb[0].mxu0
    %125 = vdwg.mxu0
    %v126 = vadd.f32 %v46, %v123
    %127 = vst [vmem:[#allocation2] sm:$0x3] %v126
    // Predicated region
    $region26: #{tpu_custom_call.1} parent=1 // pred_check
      %p128 = pneg %p41
    $region27: #{tpu_custom_call.1} parent=1 // pred_check_branch
      %130 = sbr.rel (%p128) target = $region29
    $region28: #{tpu_custom_call.1} parent=1 // pred_region
      %v131 = vld [vmem:[#allocation2] sm:$0x3]
      %v132 = vld [vmem:[%s2] sm:$0x1]
      %v134 = vlaneseq
      %v135 = vshrl.u32 %v134, 7
      %v136 = vsub.s32 0, %v135
      %v137 = vrot.slane %v132, %v136
      %v139 = vadd.f32 %v131, %v137
      %v140 = vmax.f32 %v139, 0.0
      %141 = vst [vmem:[#allocation8] sm:$0x3] %v140
    $region29: #{tpu_custom_call.1} parent=1 // pred_fallthru
      _
    // Predicated region
    $region30: #{tpu_custom_call.1} parent=1 // pred_check
      _
    $region31: #{tpu_custom_call.1} parent=1 // pred_check_branch
      %143 = sbr.rel (0) target = $region33
    $region32: #{tpu_custom_call.1} parent=1 // pred_region
      %s145 = ssub.s32 32, 32
      %146 = vsyncadd [#allocation5], %s145
      %s148 = sshll.u32 [#allocation8], 4
      %s149 = int_to_ptr.vmem [resolvable:$true] %s148
      %151 = dma.vmem_to_hbm [thread:$0]  %s149, 32, %s3, [#allocation5]
    $region33: #{tpu_custom_call.1} parent=1 // pred_fallthru
      _
    // Predicated region
    $region34: #{tpu_custom_call.1} parent=1 // pred_check
      _
    $region35: #{tpu_custom_call.1} parent=1 // pred_check_branch
      %153 = sbr.rel (0) target = $region37
    $region36: #{tpu_custom_call.1} parent=1 // pred_region
      %154 = dma.done [#allocation5], 32
    $region37: #{tpu_custom_call.1} parent=1 // pred_fallthru
      _
    %155 = vsyncpa [#allocation4], 1
    %156 = vsyncpa [#allocation7], 1
    %157 = vsyncpa [#allocation5], 1

</llo_original>
